<compile_context>
chip_gen: v7x
topology: tpu7x:2x2x1
jax: 0.10.0
libtpu: 0.0.40
codegen_flags: <defaults>
</compile_context>

<pallas_src>
import jax
import jax.numpy as jnp
from jax.experimental import pallas as pl
from jax.experimental.pallas import tpu as pltpu

_LANE = 128
# 4096 rows x 128 lanes x 4 B = 2 MiB per f32 block; 3 arrays x 2 buffers = 12 MiB,
# safely under the 32 MiB default scoped-VMEM limit on every TPU generation
# (including v7x's smaller 64 MiB physical VMEM).
_MAX_BLOCK_ROWS = 4096


def identity_kernel(x_ref, o1_ref, o2_ref):
    v = x_ref[...]
    o1_ref[...] = v
    o2_ref[...] = v


def identity_net(x):
    """Forward pass of IdentityNet: returns (x, x) as two fresh arrays.

    Note: passing input_output_aliases={0: 0} would cut HBM footprint/traffic
    further, but it requires the caller to donate x (x becomes unusable after
    the call), so it is intentionally left off to preserve call semantics.
    """
    orig_shape = x.shape
    total = x.size

    if total % _LANE == 0:
        # Lane-dense flatten: last dim exactly 128 -> unmasked full-width stores.
        rows = total // _LANE
        x2 = x.reshape(rows, _LANE)
    else:
        # Fallback for odd sizes: single full-extent 2-D slab (still one block).
        rows = 1
        x2 = x.reshape(1, total)

    block_rows = min(rows, _MAX_BLOCK_ROWS)
    grid = (pl.cdiv(rows, block_rows),)

    spec = pl.BlockSpec((block_rows, x2.shape[1]), lambda i: (i, 0))
    out_sds = jax.ShapeDtypeStruct(x2.shape, x2.dtype)

    o1, o2 = pl.pallas_call(
        identity_kernel,
        out_shape=(out_sds, out_sds),
        grid=grid,
        in_specs=[spec],
        out_specs=(spec, spec),
        compiler_params=pltpu.CompilerParams(
            dimension_semantics=("parallel",),
        ),
    )(x2)

    return o1.reshape(orig_shape), o2.reshape(orig_shape)


if __name__ == "__main__":
    key = jax.random.PRNGKey(0)
    x = jax.random.normal(key, (2, 4, 16, 16), dtype=jnp.float32)

    out1, out2 = identity_net(x)
    jax.block_until_ready((out1, out2))

    assert out1.shape == x.shape and out2.shape == x.shape
    assert out1.dtype == x.dtype and out2.dtype == x.dtype
    assert jnp.array_equal(out1, x) and jnp.array_equal(out2, x)
    print("KERNEL_OK")
</pallas_src>

<mosaic_0001>
module attributes {stable_mosaic.version = 11 : i64} {
  func.func @identity_kernel(%arg0: i32, %arg1: memref<16x128xf32, #tpu.memory_space<vmem>>, %arg2: memref<16x128xf32, #tpu.memory_space<vmem>>, %arg3: memref<16x128xf32, #tpu.memory_space<vmem>>) attributes {dimension_semantics = [#tpu.dimension_semantics<parallel>], iteration_bounds = array<i64: 1>, scalar_prefetch = 0 : i64, scratch_operands = 0 : i64, tpu.core_type = #tpu.core_type<tc>, window_params = [{transform_indices = @transform_0, window_bounds = array<i64: 16, 128>}, {transform_indices = @transform_1, window_bounds = array<i64: 16, 128>}, {transform_indices = @transform_2, window_bounds = array<i64: 16, 128>}]} {
    %c0 = arith.constant 0 : index
    %c0_0 = arith.constant 0 : index
    %0 = vector.load %arg1[%c0, %c0_0] : memref<16x128xf32, #tpu.memory_space<vmem>>, vector<16x128xf32>
    %c0_1 = arith.constant 0 : index
    %c0_2 = arith.constant 0 : index
    %1 = vector.load %arg2[%c0_1, %c0_2] : memref<16x128xf32, #tpu.memory_space<vmem>>, vector<16x128xf32>
    tpu.vector_store %arg2[%c0_1, %c0_2], %0 {strides = array<i32>} : memref<16x128xf32, #tpu.memory_space<vmem>>, vector<16x128xf32>,
    %c0_3 = arith.constant 0 : index
    %c0_4 = arith.constant 0 : index
    %2 = vector.load %arg3[%c0_3, %c0_4] : memref<16x128xf32, #tpu.memory_space<vmem>>, vector<16x128xf32>
    tpu.vector_store %arg3[%c0_3, %c0_4], %0 {strides = array<i32>} : memref<16x128xf32, #tpu.memory_space<vmem>>, vector<16x128xf32>,
    return
  }
  func.func @transform_0(%arg0: i32) -> (i32, i32) {
    %c0_i32 = arith.constant 0 : i32
    %c0_i32_0 = arith.constant 0 : i32
    return %arg0, %c0_i32 : i32, i32
  }
  func.func @transform_1(%arg0: i32) -> (i32, i32) {
    %c0_i32 = arith.constant 0 : i32
    %c0_i32_0 = arith.constant 0 : i32
    return %arg0, %c0_i32 : i32, i32
  }
  func.func @transform_2(%arg0: i32) -> (i32, i32) {
    %c0_i32 = arith.constant 0 : i32
    %c0_i32_0 = arith.constant 0 : i32
    return %arg0, %c0_i32 : i32, i32
  }
}

</mosaic_0001>

<llo_original>
// kernel: tpu_custom_call.1
$region0: #{tpu_custom_call.1}
  #allocation0 [shape = 'u32[]', space=smem, size = 0x4, offset = 0x4, fixed_abs, tag = 'smem constant byte address 0x4 - core index']
  #allocation1 [shape = 'u32[144,128]{1,0:T(1,128)}', space=vmem, size = 0x12000, scoped, tag = 'internal scratch']
  %s0 = inlined_call_operand.hbm [shape: f32[16,128], index: 0, kind: input, shape index: {}]
  %s1 = inlined_call_operand.hbm [shape: f32[16,128], index: 1, kind: output, shape index: {0}]
  %s2 = inlined_call_operand.hbm [shape: f32[16,128], index: 2, kind: output, shape index: {1}]
  %3 = xla_tuple %s1, %s2
  %s4 = sld [smem:[#allocation0]]
  $region26: #{tpu_custom_call.1} parent=0
    _
  %s6 = ssub.s32 1, %s4
  %s7 = scalar_select 0, %s6, %s4
  $region1: #{tpu_custom_call.1} parent=0
    #allocation2 [shape = 'u8[8192]{0}', space=vmem, size = 0x2000, scoped, tag = 'input window, operand 0, single buffered']
    #allocation3 [shape = 's32[1]{0}', space=sflag, size = 0x4, scoped, tag = 'scoped memory for tpu_custom_call.1']
    #allocation4 [shape = 's32[1]{0}', space=sflag, size = 0x4, scoped, tag = 'scoped memory for tpu_custom_call.1']
    #allocation5 [shape = 'u8[8192]{0}', space=vmem, size = 0x2000, scoped, tag = 'output window, operand 0, single buffered']
    #allocation6 [shape = 'u8[8192]{0}', space=vmem, size = 0x2000, scoped, tag = 'output window, operand 1, single buffered']
    #allocation7 [shape = 's32[1]{0}', space=sflag, size = 0x4, scoped, tag = 'scoped memory for tpu_custom_call.1']
    %8 = vsyncpa [#allocation3], 0
    %9 = vsyncpa [#allocation4], 0
    %10 = vsyncpa [#allocation7], 0
    // Predicated region
    $region2: #{tpu_custom_call.1} parent=1 // pred_check
      _
    $region3: #{tpu_custom_call.1} parent=1 // pred_check_branch
      %12 = sbr.rel (0) target = $region5
    $region4: #{tpu_custom_call.1} parent=1 // pred_region
      %s14 = ssub.s32 256, 256
      %15 = vsyncadd [#allocation3], %s14
      %s16 = sshll.u32 [#allocation2], 4
      %s17 = int_to_ptr.vmem [resolvable:$true] %s16
      %22 = dma.hbm_to_vmem [thread:$0]  %s0, 256, %s17, [#allocation3], 128, 128, 8
    $region5: #{tpu_custom_call.1} parent=1 // pred_fallthru
      _
    // Predicated region
    $region6: #{tpu_custom_call.1} parent=1 // pred_check
      _
    $region7: #{tpu_custom_call.1} parent=1 // pred_check_branch
      %24 = sbr.rel (0) target = $region9
    $region8: #{tpu_custom_call.1} parent=1 // pred_region
      %25 = dma.done [#allocation3], 256
    $region9: #{tpu_custom_call.1} parent=1 // pred_fallthru
      _
    %v26 = vld [vmem:[#allocation2] sm:$0xff]
    %v27 = vld [vmem:[#allocation2 + $0x8] sm:$0xff]
    %28 = vst [vmem:[#allocation5] sm:$0xff] %v26
    %29 = vst [vmem:[#allocation5 + $0x8] sm:$0xff] %v27
    %30 = vst [vmem:[#allocation6] sm:$0xff] %v26
    %31 = vst [vmem:[#allocation6 + $0x8] sm:$0xff] %v27
    // Predicated region
    $region10: #{tpu_custom_call.1} parent=1 // pred_check
      _
    $region11: #{tpu_custom_call.1} parent=1 // pred_check_branch
      %33 = sbr.rel (0) target = $region13
    $region12: #{tpu_custom_call.1} parent=1 // pred_region
      %s35 = ssub.s32 256, 256
      %36 = vsyncadd [#allocation4], %s35
      %s37 = sshll.u32 [#allocation5], 4
      %s38 = int_to_ptr.vmem [resolvable:$true] %s37
      %43 = dma.vmem_to_hbm [thread:$0]  %s38, 256, %s1, [#allocation4], 128, 128, 8
    $region13: #{tpu_custom_call.1} parent=1 // pred_fallthru
      _
    // Predicated region
    $region14: #{tpu_custom_call.1} parent=1 // pred_check
      _
    $region15: #{tpu_custom_call.1} parent=1 // pred_check_branch
      %45 = sbr.rel (0) target = $region17
    $region16: #{tpu_custom_call.1} parent=1 // pred_region
      %s47 = ssub.s32 256, 256
      %48 = vsyncadd [#allocation7], %s47
      %s49 = sshll.u32 [#allocation6], 4
      %s50 = int_to_ptr.vmem [resolvable:$true] %s49
      %55 = dma.vmem_to_hbm [thread:$0]  %s50, 256, %s2, [#allocation7], 128, 128, 8
    $region17: #{tpu_custom_call.1} parent=1 // pred_fallthru
      _
    // Predicated region
    $region18: #{tpu_custom_call.1} parent=1 // pred_check
      _
    $region19: #{tpu_custom_call.1} parent=1 // pred_check_branch
      %57 = sbr.rel (0) target = $region21
    $region20: #{tpu_custom_call.1} parent=1 // pred_region
      %58 = dma.done [#allocation4], 256
    $region21: #{tpu_custom_call.1} parent=1 // pred_fallthru
      _
    // Predicated region
    $region22: #{tpu_custom_call.1} parent=1 // pred_check
      _
    $region23: #{tpu_custom_call.1} parent=1 // pred_check_branch
      %60 = sbr.rel (0) target = $region25
    $region24: #{tpu_custom_call.1} parent=1 // pred_region
      %61 = dma.done [#allocation7], 256
    $region25: #{tpu_custom_call.1} parent=1 // pred_fallthru
      _
    %62 = vsyncpa [#allocation3], 1
    %63 = vsyncpa [#allocation4], 1
    %64 = vsyncpa [#allocation7], 1

</llo_original>
